<compile_context>
chip_gen: v5e
topology: v5e:2x2
jax: 0.10.0
libtpu: 0.0.40
codegen_flags: <defaults>
</compile_context>

<pallas_src>
import functools

import jax
import jax.numpy as jnp
from jax.experimental import pallas as pl
from jax.experimental.pallas import tpu as pltpu


def _round_up(x, m):
    return (x + m - 1) // m * m


def _simam_kernel(x_ref, o_ref, *, inv_hw, inv_n, e_lambda):
    # x_ref / o_ref: (tile_bc, hw) block in VMEM.  The last dim is the full hw
    # extent, so reductions over axis -1 see only real data (Mosaic masks its
    # internal lane padding for the logical shape).
    x = x_ref[...].astype(jnp.float32)

    # Two-pass variance: mean, then sum of squared deviations.
    mean = jnp.sum(x, axis=-1, keepdims=True) * inv_hw        # (tile_bc, 1)
    d = x - mean
    d2 = d * d
    s = jnp.sum(d2, axis=-1, keepdims=True)                   # (tile_bc, 1)

    denom = 4.0 * (s * inv_n + e_lambda)                      # (tile_bc, 1)
    # Per-row reciprocal on the EUP (free slot) + one Newton step to restore
    # ~f32 accuracy; replaces hw divisions per row with one multiply/element.
    inv = pl.reciprocal(denom, approx=True)
    inv = inv * (2.0 - denom * inv)

    y = d2 * inv + 0.5
    attn = jax.nn.sigmoid(y)
    o_ref[...] = (x * attn).astype(o_ref.dtype)


def _pick_tile_rows(bc, hw, itemsize):
    """Row-tile size: dtype-aware sublane alignment, ~3 MiB working set per
    block, and enough grid steps for pipelining / v7x megacore sharding."""
    sublane = max(8, 32 // itemsize)            # 8 f32, 16 bf16, 32 int8/fp8
    if bc <= sublane:
        return bc                               # full-dim block (exempt)
    hw_lanes = _round_up(hw, 128)               # in-VMEM lane footprint
    # in+out blocks (double-buffered) + ~5 live f32 temporaries per element.
    per_row_bytes = hw_lanes * (4 * itemsize + 5 * 4)
    target_bytes = 3 * 1024 * 1024
    tile = max(sublane, (target_bytes // per_row_bytes) // sublane * sublane)
    # Keep >= ~8 grid steps when bc allows it: after megacore sharding each
    # v7x TensorCore still gets several steps of DMA/compute overlap.
    min_steps = 8
    tile = min(tile, max(sublane, _round_up(pl.cdiv(bc, min_steps), sublane)))
    tile = min(tile, _round_up(bc, sublane))
    return tile


def simam(x, e_lambda=1e-4):
    """SimAM forward. x: (b, c, h, w) array (any float dtype)."""
    b, c, h, w = x.shape
    hw = h * w
    n = hw - 1
    bc = b * c

    itemsize = jnp.dtype(x.dtype).itemsize
    tile_bc = _pick_tile_rows(bc, hw, itemsize)
    grid = (pl.cdiv(bc, tile_bc),)

    # Scoped-VMEM request sized from the actual block footprint (not a
    # blanket fraction of physical VMEM) so it is safe on v7x's 64 MiB/TC.
    hw_lanes = _round_up(hw, 128)
    block_bytes = tile_bc * hw_lanes * (4 * itemsize + 5 * 4)
    vmem_limit = int(min(max(2 * block_bytes, 16 * 1024 * 1024),
                         48 * 1024 * 1024))

    x2d = x.reshape(bc, hw)

    # TODO(synk): hw == 1 gives n == 0; inv_n = inf reproduces the PyTorch
    # reference's NaN output for that degenerate shape rather than guarding.
    kernel = functools.partial(
        _simam_kernel,
        inv_hw=1.0 / hw,
        inv_n=(1.0 / n) if n > 0 else float("inf"),
        e_lambda=float(e_lambda),
    )

    out2d = pl.pallas_call(
        kernel,
        out_shape=jax.ShapeDtypeStruct((bc, hw), x.dtype),
        grid_spec=pltpu.PrefetchScalarGridSpec(
            num_scalar_prefetch=0,
            grid=grid,
            in_specs=[pl.BlockSpec((tile_bc, hw), lambda i: (i, 0))],
            out_specs=pl.BlockSpec((tile_bc, hw), lambda i: (i, 0)),
        ),
        compiler_params=pltpu.CompilerParams(
            dimension_semantics=("parallel",),
            vmem_limit_bytes=vmem_limit,
        ),
    )(x2d)

    return out2d.reshape(b, c, h, w)


def simam_ref(x, e_lambda=1e-4):
    """Pure-JAX reference matching the PyTorch forward."""
    b, c, h, w = x.shape
    n = w * h - 1
    xf = x.astype(jnp.float32)
    mu = jnp.mean(xf, axis=(2, 3), keepdims=True)
    d = (xf - mu) ** 2
    s = jnp.sum(d, axis=(2, 3), keepdims=True)
    y = d / (4.0 * (s / n + e_lambda)) + 0.5
    return (xf * jax.nn.sigmoid(y)).astype(x.dtype)


if __name__ == "__main__":
    key = jax.random.PRNGKey(0)
    b, c, h, w = 2, 4, 16, 16
    x = jax.random.normal(key, (b, c, h, w), dtype=jnp.float32)

    out = jax.block_until_ready(simam(x))
    ref = simam_ref(x)

    assert out.shape == (b, c, h, w)
    # Tolerance covers the EUP approx-reciprocal seed (Newton-refined); the
    # two-pass variance otherwise matches the reference numerics.
    assert jnp.allclose(out, ref, atol=1e-4, rtol=1e-4), "mismatch vs reference"

    print("KERNEL_OK")
</pallas_src>

<mosaic_0001>
module attributes {stable_mosaic.version = 11 : i64} {
  func.func @_simam_kernel(%arg0: i32, %arg1: memref<8x256xf32, #tpu.memory_space<vmem>>, %arg2: memref<8x256xf32, #tpu.memory_space<vmem>>) attributes {dimension_semantics = [#tpu.dimension_semantics<parallel>], iteration_bounds = array<i64: 1>, scalar_prefetch = 0 : i64, scratch_operands = 0 : i64, tpu.core_type = #tpu.core_type<tc>, window_params = [{transform_indices = @transform_0, window_bounds = array<i64: 8, 256>}, {transform_indices = @transform_1, window_bounds = array<i64: 8, 256>}]} {
    %c0 = arith.constant 0 : index
    %c0_0 = arith.constant 0 : index
    %0 = vector.load %arg1[%c0, %c0_0] : memref<8x256xf32, #tpu.memory_space<vmem>>, vector<8x256xf32>
    %cst = arith.constant dense<0.000000e+00> : vector<8xf32>
    %1 = vector.multi_reduction <add>, %0, %cst [1] : vector<8x256xf32> to vector<8xf32>
    %2 = vector.shape_cast %1 : vector<8xf32> to vector<8x1xf32>
    %cst_1 = arith.constant 3.906250e-03 : f32
    %3 = vector.broadcast %cst_1 : f32 to vector<8x1xf32>
    %4 = arith.mulf %2, %3 : vector<8x1xf32>
    %5 = vector.broadcast %4 : vector<8x1xf32> to vector<8x256xf32>
    %6 = arith.subf %0, %5 : vector<8x256xf32>
    %7 = arith.mulf %6, %6 : vector<8x256xf32>
    %cst_2 = arith.constant dense<0.000000e+00> : vector<8xf32>
    %8 = vector.multi_reduction <add>, %7, %cst_2 [1] : vector<8x256xf32> to vector<8xf32>
    %9 = vector.shape_cast %8 : vector<8xf32> to vector<8x1xf32>
    %cst_3 = arith.constant 0.00392156886 : f32
    %10 = vector.broadcast %cst_3 : f32 to vector<8x1xf32>
    %11 = arith.mulf %9, %10 : vector<8x1xf32>
    %cst_4 = arith.constant 9.99999974E-5 : f32
    %12 = vector.broadcast %cst_4 : f32 to vector<8x1xf32>
    %13 = arith.addf %11, %12 : vector<8x1xf32>
    %cst_5 = arith.constant 4.000000e+00 : f32
    %14 = vector.broadcast %cst_5 : f32 to vector<8x1xf32>
    %15 = arith.mulf %14, %13 : vector<8x1xf32>
    %16 = tpu.reciprocal %15 {approx = true} : vector<8x1xf32> -> vector<8x1xf32>
    %17 = arith.mulf %15, %16 : vector<8x1xf32>
    %cst_6 = arith.constant 2.000000e+00 : f32
    %18 = vector.broadcast %cst_6 : f32 to vector<8x1xf32>
    %19 = arith.subf %18, %17 : vector<8x1xf32>
    %20 = arith.mulf %16, %19 : vector<8x1xf32>
    %21 = vector.broadcast %20 : vector<8x1xf32> to vector<8x256xf32>
    %22 = arith.mulf %7, %21 : vector<8x256xf32>
    %cst_7 = arith.constant 5.000000e-01 : f32
    %23 = vector.broadcast %cst_7 : f32 to vector<8x256xf32>
    %24 = arith.addf %22, %23 : vector<8x256xf32>
    %25 = arith.negf %24 : vector<8x256xf32>
    %26 = math.exp %25 : vector<8x256xf32>
    %cst_8 = arith.constant 1.000000e+00 : f32
    %27 = vector.broadcast %cst_8 : f32 to vector<8x256xf32>
    %28 = arith.addf %27, %26 : vector<8x256xf32>
    %29 = arith.divf %27, %28 : vector<8x256xf32>
    %30 = arith.mulf %0, %29 : vector<8x256xf32>
    %c0_9 = arith.constant 0 : index
    %c0_10 = arith.constant 0 : index
    %31 = vector.load %arg2[%c0_9, %c0_10] : memref<8x256xf32, #tpu.memory_space<vmem>>, vector<8x256xf32>
    tpu.vector_store %arg2[%c0_9, %c0_10], %30 {strides = array<i32>} : memref<8x256xf32, #tpu.memory_space<vmem>>, vector<8x256xf32>,
    return
  }
  func.func @transform_0(%arg0: i32) -> (i32, i32) {
    %c0_i32 = arith.constant 0 : i32
    %c0_i32_0 = arith.constant 0 : i32
    return %arg0, %c0_i32 : i32, i32
  }
  func.func @transform_1(%arg0: i32) -> (i32, i32) {
    %c0_i32 = arith.constant 0 : i32
    %c0_i32_0 = arith.constant 0 : i32
    return %arg0, %c0_i32 : i32, i32
  }
}

</mosaic_0001>

<llo_original>
// kernel: tpu_custom_call.1
$region0: #{tpu_custom_call.1}
  #allocation0 [shape = 'u32[]', space=smem, size = 0x4, offset = 0x4, fixed_abs, tag = 'smem constant byte address 0x4 - core index']
  #allocation1 [shape = 'u32[72,128]{1,0:T(1,128)}', space=vmem, size = 0x9000, scoped, tag = 'internal scratch']
  %s0 = inlined_call_operand.hbm [shape: f32[8,256], index: 0, kind: input, shape index: {}]
  %s1 = inlined_call_operand.hbm [shape: f32[8,256], index: 1, kind: output, shape index: {}]
  %s2 = sld [smem:[#allocation0]]
  $region18: #{tpu_custom_call.1} parent=0
    _
  %s4 = ssub.s32 1, %s2
  %s5 = scalar_select 0, %s4, %s2
  $region1: #{tpu_custom_call.1} parent=0
    #allocation2 [shape = 'u8[8192]{0}', space=vmem, size = 0x2000, scoped, tag = 'input window, operand 0, single buffered']
    #allocation3 [shape = 's32[1]{0}', space=sflag, size = 0x4, scoped, tag = 'scoped memory for tpu_custom_call.1']
    #allocation4 [shape = 's32[1]{0}', space=sflag, size = 0x4, scoped, tag = 'scoped memory for tpu_custom_call.1']
    #allocation5 [shape = 'u8[8192]{0}', space=vmem, size = 0x2000, scoped, tag = 'output window, operand 0, single buffered']
    %6 = vsyncpa [#allocation3], 0
    %7 = vsyncpa [#allocation4], 0
    // Predicated region
    $region2: #{tpu_custom_call.1} parent=1 // pred_check
      _
    $region3: #{tpu_custom_call.1} parent=1 // pred_check_branch
      %9 = sbr.rel (0) target = $region5
    $region4: #{tpu_custom_call.1} parent=1 // pred_region
      %11 = vsyncadd [#allocation3], 0
      %s13 = sshll.u32 %s0, 4
      %s14 = int_to_ptr.hbm [resolvable:$true] %s13
      %s15 = sshll.u32 [#allocation2], 4
      %s16 = int_to_ptr.vmem [resolvable:$true] %s15
      %18 = dma.hbm_to_vmem [thread:$0]  %s14, 256, %s16, [#allocation3]
    $region5: #{tpu_custom_call.1} parent=1 // pred_fallthru
      _
    // Predicated region
    $region6: #{tpu_custom_call.1} parent=1 // pred_check
      _
    $region7: #{tpu_custom_call.1} parent=1 // pred_check_branch
      %20 = sbr.rel (0) target = $region9
    $region8: #{tpu_custom_call.1} parent=1 // pred_region
      %22 = dma.done [#allocation3], 256
    $region9: #{tpu_custom_call.1} parent=1 // pred_fallthru
      _
    %v23 = vld [vmem:[#allocation2] sm:$0xff]
    %v24 = vld [vmem:[#allocation2 + $0x8] sm:$0xff]
    %v25 = vadd.f32 %v23, %v24
    %26 = vadd.xlane.f32.xlu0 %v25
    %v27 = vpop.xlane.xlu0 %26
    %v28 = vmul.f32 %v27, 0.00390625
    %v29 = vsub.f32 %v23, %v28
    %v30 = vsub.f32 %v24, %v28
    %v31 = vmul.f32 %v29, %v29
    %v32 = vmul.f32 %v30, %v30
    %v33 = vadd.f32 %v31, %v32
    %34 = vadd.xlane.f32.xlu0 %v33
    %v35 = vpop.xlane.xlu0 %34
    %v36 = vmul.f32 %v35, 0.003921569
    %v37 = vadd.f32 %v36, 0.0001
    %v38 = vmul.f32 %v37, 4.0
    %v39 = vrcp.pop %v38
    %v40 = vmul.f32 %v38, %v39
    %v41 = vsub.f32 2.0, %v40
    %v42 = vmul.f32 %v39, %v41
    %v43 = vmul.f32 %v31, %v42
    %v44 = vmul.f32 %v32, %v42
    %v45 = vadd.f32 %v43, 0.5
    %v46 = vadd.f32 %v44, 0.5
    %v47 = vxor.u32 %v45, 2147483648
    %v48 = vxor.u32 %v46, 2147483648
    %v49 = vmul.f32 %v47, 1.442695
    %v50 = vpow.pop %v49
    %v51 = vmul.f32 %v48, 1.442695
    %v52 = vpow.pop %v51
    %v53 = vadd.f32 %v50, 1.0
    %v54 = vadd.f32 %v52, 1.0
    %v55 = vrcp.pop %v53
    %v56 = vmul.f32 %v53, %v55
    %v57 = vsub.f32 1.0, %v56
    %v58 = vmul.f32 %v55, %v57
    %v59 = vadd.f32 %v55, %v58
    %vm60 = vweird.f32 %v53
    %vm61 = vweird.f32 %v55
    %vm62 = vmor %vm60, %vm61
    %v63 = vsel %vm62, %v55, %v59
    %v64 = vand.u32 2147483647, %v53
    %vm65 = vcmp.eq.f32.partialorder %v64, 8.507059e+37
    %v66 = vand.u32 %v53, 2147483648
    %v67 = vor.u32 1.1754944e-38, %v66
    %v68 = vsel %vm65, %v67, %v63
    %v69 = vmul.f32 1.0, %v68
    %v70 = vrcp.pop %v54
    %v71 = vmul.f32 %v54, %v70
    %v72 = vsub.f32 1.0, %v71
    %v73 = vmul.f32 %v70, %v72
    %v74 = vadd.f32 %v70, %v73
    %vm75 = vweird.f32 %v54
    %vm76 = vweird.f32 %v70
    %vm77 = vmor %vm75, %vm76
    %v78 = vsel %vm77, %v70, %v74
    %v79 = vand.u32 2147483647, %v54
    %vm80 = vcmp.eq.f32.partialorder %v79, 8.507059e+37
    %v81 = vand.u32 %v54, 2147483648
    %v82 = vor.u32 1.1754944e-38, %v81
    %v83 = vsel %vm80, %v82, %v78
    %v84 = vmul.f32 1.0, %v83
    %v85 = vmul.f32 %v23, %v69
    %v86 = vmul.f32 %v24, %v84
    %87 = vst [vmem:[#allocation5] sm:$0xff] %v85
    %88 = vst [vmem:[#allocation5 + $0x8] sm:$0xff] %v86
    // Predicated region
    $region10: #{tpu_custom_call.1} parent=1 // pred_check
      _
    $region11: #{tpu_custom_call.1} parent=1 // pred_check_branch
      %90 = sbr.rel (0) target = $region13
    $region12: #{tpu_custom_call.1} parent=1 // pred_region
      %92 = vsyncadd [#allocation4], 0
      %s94 = sshll.u32 [#allocation5], 4
      %s95 = int_to_ptr.vmem [resolvable:$true] %s94
      %s96 = sshll.u32 %s1, 4
      %s97 = int_to_ptr.hbm [resolvable:$true] %s96
      %99 = dma.vmem_to_hbm [thread:$0]  %s95, 256, %s97, [#allocation4]
    $region13: #{tpu_custom_call.1} parent=1 // pred_fallthru
      _
    // Predicated region
    $region14: #{tpu_custom_call.1} parent=1 // pred_check
      _
    $region15: #{tpu_custom_call.1} parent=1 // pred_check_branch
      %101 = sbr.rel (0) target = $region17
    $region16: #{tpu_custom_call.1} parent=1 // pred_region
      %103 = dma.done [#allocation4], 256
    $region17: #{tpu_custom_call.1} parent=1 // pred_fallthru
      _
    %104 = vsyncpa [#allocation3], 1
    %105 = vsyncpa [#allocation4], 1

</llo_original>
